<compile_context>
chip_gen: v6e
topology: v6e:2x2x1
jax: 0.10.0
libtpu: 0.0.40
codegen_flags: <defaults>
</compile_context>

<pallas_src>
import functools

import jax
import jax.numpy as jnp
from jax.experimental import pallas as pl
from jax.experimental.pallas import tpu as pltpu


def _shift_flat(v, k):
    """out[..., i] = v[..., (i + k) mod n] for a static shift k in [0, n)."""
    if k == 0:
        return v
    n = v.shape[-1]
    hi = jax.lax.slice_in_dim(v, k, n, axis=v.ndim - 1)
    lo = jax.lax.slice_in_dim(v, 0, k, axis=v.ndim - 1)
    return jax.lax.concatenate([hi, lo], dimension=v.ndim - 1)


# ----------------------------- fast path (stride 1) ------------------------


def _basic_conv_s1_kernel(x_ref, w_ref, mask_ref, bias_ref, o_ref, *, K, H, W, pad):
    """One grid step = one batch element (stride 1, odd K).

    x_ref:    (1, Cin, H*W)   f32  flattened NCHW image (spatial on lanes)
    w_ref:    (Cout, K*K*Cin) bf16 BN-scale-folded weights, tap-major columns
    mask_ref: (K*K, H*W)      f32  1.0 where a tap's shifted source is in-bounds
    bias_ref: (Cout, 1)       f32  folded BN bias
    o_ref:    (1, Cout, H*W)       lane-dense output block
    """
    hw = H * W
    x = x_ref[0]            # (Cin, H*W)
    mask = mask_ref[...]    # (K*K, H*W)

    # im2col: K*K logically zero-padded, shifted copies of the image stacked
    # along the contraction axis.  The shifts are lane rotations; the masks zero
    # positions whose source pixel falls outside the (unpadded) image.
    rows = []
    for kh in range(K):
        for kw in range(K):
            t = kh * K + kw
            delta = (kh - pad) * W + (kw - pad)   # flat source offset of this tap
            if delta == 0:
                rows.append(x)
            else:
                rows.append(_shift_flat(x, delta % hw) * mask[t:t + 1, :])
    patches = jnp.concatenate(rows, axis=0).astype(jnp.bfloat16)  # (K*K*Cin, H*W)

    # One MXU matmul with a K*K*Cin-wide contraction, f32 accumulation.
    acc = jnp.dot(w_ref[...], patches, preferred_element_type=jnp.float32)

    # Folded-BN bias + LeakyReLU(0.1) epilogue.
    y = acc + bias_ref[...]
    y = jnp.where(y > 0, y, 0.1 * y)
    o_ref[0] = y.astype(o_ref.dtype)


def _tap_masks(H, W, K, pad, dtype=jnp.float32):
    """(K*K, H*W) validity masks: 1.0 where tap (kh,kw) reads inside the image."""
    hh = jnp.arange(H, dtype=jnp.int32).reshape(H, 1)
    ww = jnp.arange(W, dtype=jnp.int32).reshape(1, W)
    rows = []
    for kh in range(K):
        for kw in range(K):
            dh, dw = kh - pad, kw - pad
            m = ((hh + dh >= 0) & (hh + dh < H) & (ww + dw >= 0) & (ww + dw < W))
            rows.append(m.reshape(1, H * W))
    return jnp.concatenate(rows, axis=0).astype(dtype)


def _basic_conv_s1(x_nchw, w_oihw, gamma, beta, running_mean, running_var, eps):
    N, Cin, H, W = x_nchw.shape
    Cout, _, K, _ = w_oihw.shape
    pad = K // 2
    hw = H * W

    # Folded BatchNorm (inference): bn(conv(x)) = conv_{scale*w}(x) + bias.
    scale = gamma * jax.lax.rsqrt(running_var + eps)
    bias = (beta - running_mean * scale).reshape(Cout, 1).astype(jnp.float32)
    # OIHW -> (Cout, K*K*Cin) with tap-major columns, BN scale folded in, bf16.
    w2 = (jnp.transpose(w_oihw, (0, 2, 3, 1)).reshape(Cout, K * K * Cin)
          * scale[:, None]).astype(jnp.bfloat16)

    mask = _tap_masks(H, W, K, pad)
    x_flat = x_nchw.reshape(N, Cin, hw)       # free reshape, no HBM pass

    kernel = functools.partial(_basic_conv_s1_kernel, K=K, H=H, W=W, pad=pad)

    out = pl.pallas_call(
        kernel,
        out_shape=jax.ShapeDtypeStruct((N, Cout, hw), x_nchw.dtype),
        grid=(N,),
        in_specs=[
            pl.BlockSpec((1, Cin, hw), lambda n: (n, 0, 0)),
            pl.BlockSpec((Cout, K * K * Cin), lambda n: (0, 0)),
            pl.BlockSpec((K * K, hw), lambda n: (0, 0)),
            pl.BlockSpec((Cout, 1), lambda n: (0, 0)),
        ],
        out_specs=pl.BlockSpec((1, Cout, hw), lambda n: (n, 0, 0)),
        compiler_params=pltpu.CompilerParams(
            dimension_semantics=("parallel",),
            # TODO(synk): re-derive against v7x's 64 MiB VMEM once a spatial
            # strip axis is added for large images.
            vmem_limit_bytes=32 * 1024 * 1024,
        ),
    )(x_flat, w2, mask, bias)

    return out.reshape(N, Cout, H, W)


# -------------------- general fallback (stride > 1 / even K) ----------------
# TODO(synk): port the lane-dense / fused-im2col optimizations to this path.


def _basic_conv_general_kernel(x_ref, w_ref, scale_ref, bias_ref, o_ref,
                               *, K, S, Ho, Wo):
    x = x_ref[0]                      # (Hp, Wp, Cin)
    cin = x.shape[-1]
    cout = o_ref.shape[-1]
    acc = jnp.zeros((Ho * Wo, cout), jnp.float32)
    for kh in range(K):
        for kw in range(K):
            patch = jax.lax.slice(
                x, (kh, kw, 0),
                (kh + (Ho - 1) * S + 1, kw + (Wo - 1) * S + 1, cin),
                (S, S, 1))
            acc = acc + jnp.dot(patch.reshape(Ho * Wo, cin), w_ref[kh, kw],
                                preferred_element_type=jnp.float32)
    y = acc * scale_ref[...] + bias_ref[...]
    y = jnp.where(y > 0, y, 0.1 * y)
    o_ref[0] = y.reshape(Ho, Wo, cout).astype(o_ref.dtype)


def _basic_conv_general(x_nchw, w_oihw, gamma, beta, running_mean, running_var,
                        stride, eps):
    N, Cin, H, W = x_nchw.shape
    Cout, _, K, _ = w_oihw.shape
    pad = K // 2
    Ho = (H + 2 * pad - K) // stride + 1
    Wo = (W + 2 * pad - K) // stride + 1
    Hp, Wp = H + 2 * pad, W + 2 * pad

    x = jnp.transpose(x_nchw, (0, 2, 3, 1))
    x = jnp.pad(x, ((0, 0), (pad, pad), (pad, pad), (0, 0)))
    w = jnp.transpose(w_oihw, (2, 3, 1, 0))
    scale = gamma * jax.lax.rsqrt(running_var + eps)
    bias = beta - running_mean * scale
    scale2 = scale.reshape(1, Cout).astype(jnp.float32)
    bias2 = bias.reshape(1, Cout).astype(jnp.float32)

    kernel = functools.partial(_basic_conv_general_kernel, K=K, S=stride,
                               Ho=Ho, Wo=Wo)

    out_nhwc = pl.pallas_call(
        kernel,
        out_shape=jax.ShapeDtypeStruct((N, Ho, Wo, Cout), x_nchw.dtype),
        grid=(N,),
        in_specs=[
            pl.BlockSpec((1, Hp, Wp, Cin), lambda n: (n, 0, 0, 0)),
            pl.BlockSpec((K, K, Cin, Cout), lambda n: (0, 0, 0, 0)),
            pl.BlockSpec((1, Cout), lambda n: (0, 0)),
            pl.BlockSpec((1, Cout), lambda n: (0, 0)),
        ],
        out_specs=pl.BlockSpec((1, Ho, Wo, Cout), lambda n: (n, 0, 0, 0)),
        compiler_params=pltpu.CompilerParams(dimension_semantics=("parallel",)),
    )(x, w, scale2, bias2)

    return jnp.transpose(out_nhwc, (0, 3, 1, 2))


# --------------------------------- public API --------------------------------


@functools.partial(jax.jit, static_argnames=("stride", "eps"))
def basic_conv(x_nchw, w_oihw, gamma, beta, running_mean, running_var,
               *, stride=1, eps=1e-5):
    """Equivalent of BasicConv.forward (eval mode); NCHW in / NCHW out."""
    K = w_oihw.shape[-1]
    if stride == 1 and K % 2 == 1:
        return _basic_conv_s1(x_nchw, w_oihw, gamma, beta, running_mean,
                              running_var, eps)
    return _basic_conv_general(x_nchw, w_oihw, gamma, beta, running_mean,
                               running_var, stride, eps)


def _reference(x_nchw, w_oihw, gamma, beta, running_mean, running_var,
               *, stride=1, eps=1e-5):
    """Pure-JAX (f32) reference for correctness checking."""
    K = w_oihw.shape[-1]
    pad = K // 2
    y = jax.lax.conv_general_dilated(
        x_nchw, w_oihw, (stride, stride),
        padding=[(pad, pad), (pad, pad)],
        dimension_numbers=("NCHW", "OIHW", "NCHW"))
    scale = gamma / jnp.sqrt(running_var + eps)
    bias = beta - running_mean * scale
    y = y * scale[None, :, None, None] + bias[None, :, None, None]
    return jnp.where(y > 0, y, 0.1 * y)


if __name__ == "__main__":
    N, Cin, Cout, H, W, K, stride = 2, 4, 8, 16, 16, 3, 1

    key = jax.random.PRNGKey(0)
    kx, kw, kg, kb, km, kv = jax.random.split(key, 6)

    x = jax.random.normal(kx, (N, Cin, H, W), dtype=jnp.float32)
    # Conv2d weight: (out_channels, in_channels, K, K), bias=False.
    w = jax.random.normal(kw, (Cout, Cin, K, K), dtype=jnp.float32) * 0.1
    # BatchNorm2d parameters / running stats.
    gamma = 1.0 + 0.1 * jax.random.normal(kg, (Cout,), dtype=jnp.float32)
    beta = 0.1 * jax.random.normal(kb, (Cout,), dtype=jnp.float32)
    running_mean = 0.1 * jax.random.normal(km, (Cout,), dtype=jnp.float32)
    running_var = jnp.abs(jax.random.normal(kv, (Cout,), dtype=jnp.float32)) + 0.5

    out = jax.block_until_ready(
        basic_conv(x, w, gamma, beta, running_mean, running_var, stride=stride))
    ref = jax.block_until_ready(
        _reference(x, w, gamma, beta, running_mean, running_var, stride=stride))

    assert out.shape == ref.shape == (N, Cout, H, W), (out.shape, ref.shape)
    # bf16 matmul operands with f32 accumulation -> tolerance sized for bf16.
    assert jnp.allclose(out, ref, atol=5e-2, rtol=5e-2), float(
        jnp.max(jnp.abs(out - ref)))

    print("KERNEL_OK")
</pallas_src>

<mosaic_0001>
module attributes {stable_mosaic.version = 11 : i64} {
  func.func @_basic_conv_s1_kernel(%arg0: i32, %arg1: memref<1x4x256xf32, #tpu.memory_space<vmem>>, %arg2: memref<8x36xbf16, #tpu.memory_space<vmem>>, %arg3: memref<9x256xf32, #tpu.memory_space<vmem>>, %arg4: memref<8x1xf32, #tpu.memory_space<vmem>>, %arg5: memref<1x8x256xf32, #tpu.memory_space<vmem>>) attributes {dimension_semantics = [#tpu.dimension_semantics<parallel>], iteration_bounds = array<i64: 2>, scalar_prefetch = 0 : i64, scratch_operands = 0 : i64, tpu.core_type = #tpu.core_type<tc>, window_params = [{transform_indices = @transform_0, window_bounds = array<i64: 1, 4, 256>}, {pipeline_mode = #tpu.pipeline_mode<synchronous>, transform_indices = @transform_1, window_bounds = array<i64: 8, 36>}, {pipeline_mode = #tpu.pipeline_mode<synchronous>, transform_indices = @transform_2, window_bounds = array<i64: 9, 256>}, {pipeline_mode = #tpu.pipeline_mode<synchronous>, transform_indices = @transform_3, window_bounds = array<i64: 8, 1>}, {transform_indices = @transform_4, window_bounds = array<i64: 1, 8, 256>}]} {
    %c0 = arith.constant 0 : index
    %c0_0 = arith.constant 0 : index
    %c0_1 = arith.constant 0 : index
    %0 = vector.load %arg1[%c0, %c0_0, %c0_1] : memref<1x4x256xf32, #tpu.memory_space<vmem>>, vector<1x4x256xf32>
    %1 = vector.shape_cast %0 : vector<1x4x256xf32> to vector<4x256xf32>
    %c0_2 = arith.constant 0 : index
    %c0_3 = arith.constant 0 : index
    %2 = vector.load %arg3[%c0_2, %c0_3] : memref<9x256xf32, #tpu.memory_space<vmem>>, vector<9x256xf32>
    %3 = vector.extract_strided_slice %1 {offsets = [0, 239], sizes = [4, 17], strides = [1, 1]} : vector<4x256xf32> to vector<4x17xf32>
    %4 = vector.extract_strided_slice %1 {offsets = [0, 0], sizes = [4, 239], strides = [1, 1]} : vector<4x256xf32> to vector<4x239xf32>
    %5 = tpu.concatenate %3, %4 in 1 : vector<4x17xf32>, vector<4x239xf32> -> vector<4x256xf32>
    %6 = vector.extract_strided_slice %2 {offsets = [0, 0], sizes = [1, 256], strides = [1, 1]} : vector<9x256xf32> to vector<1x256xf32>
    %7 = vector.broadcast %6 : vector<1x256xf32> to vector<4x256xf32>
    %8 = arith.mulf %5, %7 : vector<4x256xf32>
    %9 = vector.extract_strided_slice %1 {offsets = [0, 240], sizes = [4, 16], strides = [1, 1]} : vector<4x256xf32> to vector<4x16xf32>
    %10 = vector.extract_strided_slice %1 {offsets = [0, 0], sizes = [4, 240], strides = [1, 1]} : vector<4x256xf32> to vector<4x240xf32>
    %11 = tpu.concatenate %9, %10 in 1 : vector<4x16xf32>, vector<4x240xf32> -> vector<4x256xf32>
    %12 = vector.extract_strided_slice %2 {offsets = [1, 0], sizes = [1, 256], strides = [1, 1]} : vector<9x256xf32> to vector<1x256xf32>
    %13 = vector.broadcast %12 : vector<1x256xf32> to vector<4x256xf32>
    %14 = arith.mulf %11, %13 : vector<4x256xf32>
    %15 = vector.extract_strided_slice %1 {offsets = [0, 241], sizes = [4, 15], strides = [1, 1]} : vector<4x256xf32> to vector<4x15xf32>
    %16 = vector.extract_strided_slice %1 {offsets = [0, 0], sizes = [4, 241], strides = [1, 1]} : vector<4x256xf32> to vector<4x241xf32>
    %17 = tpu.concatenate %15, %16 in 1 : vector<4x15xf32>, vector<4x241xf32> -> vector<4x256xf32>
    %18 = vector.extract_strided_slice %2 {offsets = [2, 0], sizes = [1, 256], strides = [1, 1]} : vector<9x256xf32> to vector<1x256xf32>
    %19 = vector.broadcast %18 : vector<1x256xf32> to vector<4x256xf32>
    %20 = arith.mulf %17, %19 : vector<4x256xf32>
    %21 = vector.extract_strided_slice %1 {offsets = [0, 255], sizes = [4, 1], strides = [1, 1]} : vector<4x256xf32> to vector<4x1xf32>
    %22 = vector.extract_strided_slice %1 {offsets = [0, 0], sizes = [4, 255], strides = [1, 1]} : vector<4x256xf32> to vector<4x255xf32>
    %23 = tpu.concatenate %21, %22 in 1 : vector<4x1xf32>, vector<4x255xf32> -> vector<4x256xf32>
    %24 = vector.extract_strided_slice %2 {offsets = [3, 0], sizes = [1, 256], strides = [1, 1]} : vector<9x256xf32> to vector<1x256xf32>
    %25 = vector.broadcast %24 : vector<1x256xf32> to vector<4x256xf32>
    %26 = arith.mulf %23, %25 : vector<4x256xf32>
    %27 = vector.extract_strided_slice %1 {offsets = [0, 1], sizes = [4, 255], strides = [1, 1]} : vector<4x256xf32> to vector<4x255xf32>
    %28 = vector.extract_strided_slice %1 {offsets = [0, 0], sizes = [4, 1], strides = [1, 1]} : vector<4x256xf32> to vector<4x1xf32>
    %29 = tpu.concatenate %27, %28 in 1 : vector<4x255xf32>, vector<4x1xf32> -> vector<4x256xf32>
    %30 = vector.extract_strided_slice %2 {offsets = [5, 0], sizes = [1, 256], strides = [1, 1]} : vector<9x256xf32> to vector<1x256xf32>
    %31 = vector.broadcast %30 : vector<1x256xf32> to vector<4x256xf32>
    %32 = arith.mulf %29, %31 : vector<4x256xf32>
    %33 = vector.extract_strided_slice %1 {offsets = [0, 15], sizes = [4, 241], strides = [1, 1]} : vector<4x256xf32> to vector<4x241xf32>
    %34 = vector.extract_strided_slice %1 {offsets = [0, 0], sizes = [4, 15], strides = [1, 1]} : vector<4x256xf32> to vector<4x15xf32>
    %35 = tpu.concatenate %33, %34 in 1 : vector<4x241xf32>, vector<4x15xf32> -> vector<4x256xf32>
    %36 = vector.extract_strided_slice %2 {offsets = [6, 0], sizes = [1, 256], strides = [1, 1]} : vector<9x256xf32> to vector<1x256xf32>
    %37 = vector.broadcast %36 : vector<1x256xf32> to vector<4x256xf32>
    %38 = arith.mulf %35, %37 : vector<4x256xf32>
    %39 = vector.extract_strided_slice %1 {offsets = [0, 16], sizes = [4, 240], strides = [1, 1]} : vector<4x256xf32> to vector<4x240xf32>
    %40 = vector.extract_strided_slice %1 {offsets = [0, 0], sizes = [4, 16], strides = [1, 1]} : vector<4x256xf32> to vector<4x16xf32>
    %41 = tpu.concatenate %39, %40 in 1 : vector<4x240xf32>, vector<4x16xf32> -> vector<4x256xf32>
    %42 = vector.extract_strided_slice %2 {offsets = [7, 0], sizes = [1, 256], strides = [1, 1]} : vector<9x256xf32> to vector<1x256xf32>
    %43 = vector.broadcast %42 : vector<1x256xf32> to vector<4x256xf32>
    %44 = arith.mulf %41, %43 : vector<4x256xf32>
    %45 = vector.extract_strided_slice %1 {offsets = [0, 17], sizes = [4, 239], strides = [1, 1]} : vector<4x256xf32> to vector<4x239xf32>
    %46 = vector.extract_strided_slice %1 {offsets = [0, 0], sizes = [4, 17], strides = [1, 1]} : vector<4x256xf32> to vector<4x17xf32>
    %47 = tpu.concatenate %45, %46 in 1 : vector<4x239xf32>, vector<4x17xf32> -> vector<4x256xf32>
    %48 = vector.extract_strided_slice %2 {offsets = [8, 0], sizes = [1, 256], strides = [1, 1]} : vector<9x256xf32> to vector<1x256xf32>
    %49 = vector.broadcast %48 : vector<1x256xf32> to vector<4x256xf32>
    %50 = arith.mulf %47, %49 : vector<4x256xf32>
    %51 = tpu.concatenate %8, %14, %20, %26, %1, %32, %38, %44, %50 in 0 : vector<4x256xf32>, vector<4x256xf32>, vector<4x256xf32>, vector<4x256xf32>, vector<4x256xf32>, vector<4x256xf32>, vector<4x256xf32>, vector<4x256xf32>, vector<4x256xf32> -> vector<36x256xf32>
    %52 = arith.truncf %51 : vector<36x256xf32> to vector<36x256xbf16>
    %c0_4 = arith.constant 0 : index
    %c0_5 = arith.constant 0 : index
    %53 = vector.load %arg2[%c0_4, %c0_5] : memref<8x36xbf16, #tpu.memory_space<vmem>>, vector<8x36xbf16>
    %cst = arith.constant dense<0.000000e+00> : vector<8x256xf32>
    %54 = tpu.matmul %53, %52, %cst {dimension_numbers = #tpu.dot_dimension_numbers<[1], [0], [0], [1], [0, 0, 1, 1], [], []>} : vector<8x36xbf16>, vector<36x256xbf16>, vector<8x256xf32> -> vector<8x256xf32>
    %c0_6 = arith.constant 0 : index
    %c0_7 = arith.constant 0 : index
    %55 = vector.load %arg4[%c0_6, %c0_7] : memref<8x1xf32, #tpu.memory_space<vmem>>, vector<8x1xf32>
    %56 = vector.broadcast %55 : vector<8x1xf32> to vector<8x256xf32>
    %57 = arith.addf %54, %56 : vector<8x256xf32>
    %cst_8 = arith.constant 0.000000e+00 : f32
    %58 = vector.broadcast %cst_8 : f32 to vector<8x256xf32>
    %59 = arith.cmpf ogt, %57, %58 : vector<8x256xf32>
    %cst_9 = arith.constant 1.000000e-01 : f32
    %60 = vector.broadcast %cst_9 : f32 to vector<8x256xf32>
    %61 = arith.mulf %60, %57 : vector<8x256xf32>
    %62 = arith.select %59, %57, %61 : vector<8x256xi1>, vector<8x256xf32>
    %c0_10 = arith.constant 0 : index
    %c0_11 = arith.constant 0 : index
    %c0_12 = arith.constant 0 : index
    %63 = vector.load %arg5[%c0_10, %c0_11, %c0_12] : memref<1x8x256xf32, #tpu.memory_space<vmem>>, vector<1x8x256xf32>
    %64 = vector.shape_cast %63 : vector<1x8x256xf32> to vector<8x256xf32>
    %65 = vector.shape_cast %62 : vector<8x256xf32> to vector<1x8x256xf32>
    tpu.vector_store %arg5[%c0_10, %c0_11, %c0_12], %65 {strides = array<i32>} : memref<1x8x256xf32, #tpu.memory_space<vmem>>, vector<1x8x256xf32>,
    return
  }
  func.func @transform_0(%arg0: i32) -> (i32, i32, i32) {
    %c0_i32 = arith.constant 0 : i32
    %c0_i32_0 = arith.constant 0 : i32
    %c0_i32_1 = arith.constant 0 : i32
    return %arg0, %c0_i32, %c0_i32_0 : i32, i32, i32
  }
  func.func @transform_1(%arg0: i32) -> (i32, i32) {
    %c0_i32 = arith.constant 0 : i32
    %c0_i32_0 = arith.constant 0 : i32
    %c0_i32_1 = arith.constant 0 : i32
    return %c0_i32, %c0_i32_0 : i32, i32
  }
  func.func @transform_2(%arg0: i32) -> (i32, i32) {
    %c0_i32 = arith.constant 0 : i32
    %c0_i32_0 = arith.constant 0 : i32
    %c0_i32_1 = arith.constant 0 : i32
    return %c0_i32, %c0_i32_0 : i32, i32
  }
  func.func @transform_3(%arg0: i32) -> (i32, i32) {
    %c0_i32 = arith.constant 0 : i32
    %c0_i32_0 = arith.constant 0 : i32
    %c0_i32_1 = arith.constant 0 : i32
    return %c0_i32, %c0_i32_0 : i32, i32
  }
  func.func @transform_4(%arg0: i32) -> (i32, i32, i32) {
    %c0_i32 = arith.constant 0 : i32
    %c0_i32_0 = arith.constant 0 : i32
    %c0_i32_1 = arith.constant 0 : i32
    return %arg0, %c0_i32, %c0_i32_0 : i32, i32, i32
  }
}

</mosaic_0001>

<llo_original>
// kernel: basic_conv.1
$region0: #{basic_conv.1}
  #allocation0 [shape = 'u32[]', space=smem, size = 0x4, offset = 0x4, fixed_abs, tag = 'smem constant byte address 0x4 - core index']
  #allocation1 [shape = 'u32[144,128]{1,0:T(1,128)}', space=vmem, size = 0x12000, scoped, tag = 'internal scratch']
  %s0 = inlined_call_operand.vmem [shape: f32[2,4,256], index: 0, kind: input, shape index: {}]
  %s1 = inlined_call_operand.vmem [shape: bf16[8,36], index: 1, kind: input, shape index: {}]
  %s2 = inlined_call_operand.vmem [shape: f32[9,256], index: 2, kind: input, shape index: {}]
  %s3 = inlined_call_operand.vmem [shape: f32[8,1], index: 3, kind: input, shape index: {}]
  %s4 = inlined_call_operand.vmem [shape: f32[2,8,256], index: 4, kind: output, shape index: {}]
  %s5 = sld [smem:[#allocation0]]
  $region49: #{basic_conv.1} parent=0
    _
  %s7 = ssub.s32 1, %s5
  %s8 = scalar_select 0, %s7, %s5
  loop: start=0, step=1, limit=4
  $region2: #{basic_conv.1} parent=0 // loop_pre_header
    _
  $region3: #{basic_conv.1} parent=0 // loop_header
    %s10 = sphi 0, %s14
    %p11 = scmp.ge.s32.totalorder %s10, 4
    %s20 = sphi 0, %s22
    %s23 = sphi 0, %s20
    %s24 = sphi 0, %s23
    %s40 = sphi 0, %s24
    %s44 = sphi 0, %s44
    %s46 = sphi 0, %s44
    %s47 = sphi 0, %s46
    %s61 = sphi 0, %s47
    %s65 = sphi 0, %s65
    %s67 = sphi 0, %s65
    %s68 = sphi 0, %s67
    %s82 = sphi 0, %s68
    %s86 = sphi 0, %s86
    %s88 = sphi 0, %s86
    %s89 = sphi 0, %s88
    %s103 = sphi 0, %s89
    %s109 = sphi 0, %s111
    %s112 = sphi 0, %s109
    %s113 = sphi 0, %s112
    %s129 = sphi 0, %s113
  $region4: #{basic_conv.1} parent=0 // loop_header_branch
    %13 = sbr.rel (%p11) target = $region8
  $region5: #{basic_conv.1} parent=0 // loop_body
    %s15 = ssub.s32 %s10, 1
    %s16 = ssub.s32 %s10, 2
    %s17 = sadd.s32 %s10, 1
    %s18 = ssub.s32 %s10, %s17
    %p19 = scmp.eq.s32.totalorder %s18, 0
    %s21 = sadd.s32 %s20, 1
    %s22 = scalar_select %p19, %s20, %s21
    %p25 = pneg %p19
    %p26 = scmp.eq.s32.totalorder %s10, 1
    %p27 = por %p25, %p26
    %p28 = scmp.ne.s32.totalorder %s20, %s23
    %p29 = scmp.eq.s32.totalorder %s10, 0
    %p30 = por %p28, %p29
    %p31 = scmp.ne.s32.totalorder %s20, %s23
    %p32 = scmp.eq.s32.totalorder %s15, 1
    %p33 = por %p31, %p32
    %p34 = scmp.ne.s32.totalorder %s23, %s24
    %p35 = scmp.eq.s32.totalorder %s15, 0
    %p36 = por %p34, %p35
    %p37 = scmp.ne.s32.totalorder %s23, %s24
    %p38 = scmp.eq.s32.totalorder %s16, 1
    %p39 = por %p37, %p38
    %p41 = scmp.ne.s32.totalorder %s24, %s40
    %p42 = scmp.eq.s32.totalorder %s16, 0
    %p43 = por %p41, %p42
    %s45 = sadd.s32 %s44, 1
    %p48 = scmp.eq.s32.totalorder %s10, 1
    %p49 = scmp.ne.s32.totalorder %s44, %s46
    %p50 = scmp.eq.s32.totalorder %s10, 0
    %p51 = por %p49, %p50
    %p52 = scmp.ne.s32.totalorder %s44, %s46
    %p53 = scmp.eq.s32.totalorder %s15, 1
    %p54 = por %p52, %p53
    %p55 = scmp.ne.s32.totalorder %s46, %s47
    %p56 = scmp.eq.s32.totalorder %s15, 0
    %p57 = por %p55, %p56
    %p58 = scmp.ne.s32.totalorder %s46, %s47
    %p59 = scmp.eq.s32.totalorder %s16, 1
    %p60 = por %p58, %p59
    %p62 = scmp.ne.s32.totalorder %s47, %s61
    %p63 = scmp.eq.s32.totalorder %s16, 0
    %p64 = por %p62, %p63
    %s66 = sadd.s32 %s65, 1
    %p69 = scmp.eq.s32.totalorder %s10, 1
    %p70 = scmp.ne.s32.totalorder %s65, %s67
    %p71 = scmp.eq.s32.totalorder %s10, 0
    %p72 = por %p70, %p71
    %p73 = scmp.ne.s32.totalorder %s65, %s67
    %p74 = scmp.eq.s32.totalorder %s15, 1
    %p75 = por %p73, %p74
    %p76 = scmp.ne.s32.totalorder %s67, %s68
    %p77 = scmp.eq.s32.totalorder %s15, 0
    %p78 = por %p76, %p77
    %p79 = scmp.ne.s32.totalorder %s67, %s68
    %p80 = scmp.eq.s32.totalorder %s16, 1
    %p81 = por %p79, %p80
    %p83 = scmp.ne.s32.totalorder %s68, %s82
    %p84 = scmp.eq.s32.totalorder %s16, 0
    %p85 = por %p83, %p84
    %s87 = sadd.s32 %s86, 1
    %p90 = scmp.eq.s32.totalorder %s10, 1
    %p91 = scmp.ne.s32.totalorder %s86, %s88
    %p92 = scmp.eq.s32.totalorder %s10, 0
    %p93 = por %p91, %p92
    %p94 = scmp.ne.s32.totalorder %s86, %s88
    %p95 = scmp.eq.s32.totalorder %s15, 1
    %p96 = por %p94, %p95
    %p97 = scmp.ne.s32.totalorder %s88, %s89
    %p98 = scmp.eq.s32.totalorder %s15, 0
    %p99 = por %p97, %p98
    %p100 = scmp.ne.s32.totalorder %s88, %s89
    %p101 = scmp.eq.s32.totalorder %s16, 1
    %p102 = por %p100, %p101
    %p104 = scmp.ne.s32.totalorder %s89, %s103
    %p105 = scmp.eq.s32.totalorder %s16, 0
    %p106 = por %p104, %p105
    %s107 = ssub.s32 %s10, %s17
    %p108 = scmp.eq.s32.totalorder %s107, 0
    %s110 = sadd.s32 %s109, 1
    %s111 = scalar_select %p108, %s109, %s110
    %p114 = pneg %p108
    %p115 = scmp.eq.s32.totalorder %s10, 1
    %p116 = por %p114, %p115
    %p117 = scmp.ne.s32.totalorder %s109, %s112
    %p118 = scmp.eq.s32.totalorder %s10, 0
    %p119 = por %p117, %p118
    %p120 = scmp.ne.s32.totalorder %s109, %s112
    %p121 = scmp.eq.s32.totalorder %s15, 1
    %p122 = por %p120, %p121
    %p123 = scmp.ne.s32.totalorder %s112, %s113
    %p124 = scmp.eq.s32.totalorder %s15, 0
    %p125 = por %p123, %p124
    %p126 = scmp.ne.s32.totalorder %s112, %s113
    %p127 = scmp.eq.s32.totalorder %s16, 1
    %p128 = por %p126, %p127
    %p130 = scmp.ne.s32.totalorder %s113, %s129
    %p131 = scmp.eq.s32.totalorder %s16, 0
    %p132 = por %p130, %p131
    %p133 = scmp.le.s32.totalorder 1, %s10
    %p134 = scmp.lt.s32.totalorder %s10, 3
    %p135 = pnand %p133, %p134
    %p136 = pneg %p135
    // Predicated region
    $region9: #{basic_conv.1} parent=5 // pred_check
      _
    $region10: #{basic_conv.1} parent=5 // pred_check_branch
      %138 = sbr.rel (%p135) target = $region12
    $region11: #{basic_conv.1} parent=5 // pred_region
      %s139 = ssub.s32 %s10, 1
      // Predicated region
      $region13: #{basic_conv.1} parent=11 // pred_check
        %p140 = pneg %p57
      $region14: #{basic_conv.1} parent=11 // pred_check_branch
        %142 = sbr.rel (%p140) target = $region16
      $region15: #{basic_conv.1} parent=11 // pred_region
        _
      $region16: #{basic_conv.1} parent=11 // pred_fallthru
        _
      // Predicated region
      $region17: #{basic_conv.1} parent=11 // pred_check
        %p143 = pneg %p78
      $region18: #{basic_conv.1} parent=11 // pred_check_branch
        %145 = sbr.rel (%p143) target = $region20
      $region19: #{basic_conv.1} parent=11 // pred_region
        _
      $region20: #{basic_conv.1} parent=11 // pred_fallthru
        _
      // Predicated region
      $region21: #{basic_conv.1} parent=11 // pred_check
        %p146 = pneg %p99
      $region22: #{basic_conv.1} parent=11 // pred_check_branch
        %148 = sbr.rel (%p146) target = $region24
      $region23: #{basic_conv.1} parent=11 // pred_region
        _
      $region24: #{basic_conv.1} parent=11 // pred_fallthru
        _
    $region12: #{basic_conv.1} parent=5 // pred_fallthru
      _
    %p149 = scmp.lt.s32.totalorder %s10, 2
    // Predicated region
    $region25: #{basic_conv.1} parent=5 // pred_check
      %p150 = pneg %p149
    $region26: #{basic_conv.1} parent=5 // pred_check_branch
      %152 = sbr.rel (%p150) target = $region28
    $region27: #{basic_conv.1} parent=5 // pred_region
      // Predicated region
      $region29: #{basic_conv.1} parent=27 // pred_check
        %p153 = pneg %p30
      $region30: #{basic_conv.1} parent=27 // pred_check_branch
        %155 = sbr.rel (%p153) target = $region32
      $region31: #{basic_conv.1} parent=27 // pred_region
        %p156 = scmp.lt.s32.totalorder %s10, 1
        %s157 = scalar_select %p156, %s10, 1
        %s158 = smul.addr %s157, 2
        %s159 = smul.addr %s158, 4
        %s160 = scalar_lea.vmem %s0, %s159
      $region32: #{basic_conv.1} parent=27 // pred_fallthru
        _
    $region28: #{basic_conv.1} parent=5 // pred_fallthru
      _
    %p161 = scmp.le.s32.totalorder 1, %s10
    %p162 = scmp.lt.s32.totalorder %s10, 3
    %p163 = pnand %p161, %p162
    %p164 = pneg %p163
    // Predicated region
    $region33: #{basic_conv.1} parent=5 // pred_check
      _
    $region34: #{basic_conv.1} parent=5 // pred_check_branch
      %166 = sbr.rel (%p163) target = $region36
    $region35: #{basic_conv.1} parent=5 // pred_region
      %s167 = ssub.s32 %s10, 1
      %p168 = scmp.lt.s32.totalorder %s15, 1
      %s169 = scalar_select %p168, %s15, 1
      %s170 = smul.addr %s169, 2
      %s171 = smul.addr %s170, 4
      %s172 = scalar_lea.vmem %s0, %s171
      %p173 = pneg %p36
      %p174 = pneg %p33
      %p175 = pneg %p57
      %p176 = pneg %p54
      %p177 = pneg %p78
      %p178 = pneg %p75
      %p179 = pneg %p99
      %p180 = pneg %p96
      %p181 = pneg %p125
      %p182 = pneg %p122
      %p183 = scmp.lt.s32.totalorder %s15, 1
      %s184 = scalar_select %p183, %s15, 1
      %s185 = smul.addr %s184, 2
      %s186 = smul.addr %s185, 8
      %s187 = scalar_lea.vmem %s4, %s186
      %p188 = scmp.lt.s32.totalorder %s15, 1
      %s189 = scalar_select %p188, %s15, 1
      %s190 = smul.addr %s189, 2
      %s191 = smul.addr %s190, 4
      %s192 = scalar_lea.vmem %s0, %s191
      %p193 = scmp.lt.s32.totalorder %s15, 1
      %s194 = scalar_select %p193, %s15, 1
      %s195 = smul.addr %s194, 2
      %s196 = smul.addr %s195, 8
      %s197 = scalar_lea.vmem %s4, %s196
      %v199 = vld [vmem:[%s192] sm:$0xff]
      %v200 = vld [vmem:[%s2] sm:$0xff]
      %v201 = vld [vmem:[%s2 + $0x8] sm:$0xff]
      %v202 = vld [vmem:[%s2 + $0x10] sm:$0x1]
      %v203 = vld [vmem:[%s2 + $0x18] sm:$0x1]
      %v205 = vcombine.high %v199, %v199
      %206 = vrot.lane.b32.xlu0 %v205, 17
      %v207 = vpop.permute.xlu0 %206
      %209 = vrot.lane.b32.xlu0 %v199, 17
      %v210 = vpop.permute.xlu0 %209
      %vm211 = vcmask 138240
      %v212 = vsel %vm211, %v210, %v207
      %v215 = vsel %vm211, %v207, %v210
      %v216 = vlaneseq
      %v217 = vshrl.u32 %v216, 7
      %v218 = vsub.s32 0, %v217
      %v219 = vrot.slane %v200, %v218
      %v220 = vlaneseq
      %v221 = vshrl.u32 %v220, 7
      %v222 = vsub.s32 0, %v221
      %v223 = vrot.slane %v201, %v222
      %v224 = vmul.f32 %v215, %v219
      %v225 = vmul.f32 %v212, %v223
      %226 = vrot.lane.b32.xlu0 %v205, 16
      %v227 = vpop.permute.xlu0 %226
      %229 = vrot.lane.b32.xlu0 %v199, 16
      %v230 = vpop.permute.xlu0 %229
      %vm231 = vcmask 130048
      %v232 = vsel %vm231, %v230, %v227
      %v235 = vsel %vm231, %v227, %v230
      %v236 = vlaneseq
      %v237 = vshrl.u32 %v236, 7
      %v238 = vsub.s32 1, %v237
      %v239 = vrot.slane %v200, %v238
      %v240 = vlaneseq
      %v241 = vshrl.u32 %v240, 7
      %v242 = vsub.s32 1, %v241
      %v243 = vrot.slane %v201, %v242
      %v244 = vmul.f32 %v235, %v239
      %v245 = vmul.f32 %v232, %v243
      %246 = vrot.lane.b32.xlu0 %v205, 15
      %v247 = vpop.permute.xlu0 %246
      %249 = vrot.lane.b32.xlu0 %v199, 15
      %v250 = vpop.permute.xlu0 %249
      %vm251 = vcmask 121856
      %v252 = vsel %vm251, %v250, %v247
      %v255 = vsel %vm251, %v247, %v250
      %v256 = vlaneseq
      %v257 = vshrl.u32 %v256, 7
      %v258 = vsub.s32 2, %v257
      %v259 = vrot.slane %v200, %v258
      %v260 = vlaneseq
      %v261 = vshrl.u32 %v260, 7
      %v262 = vsub.s32 2, %v261
      %v263 = vrot.slane %v201, %v262
      %v264 = vmul.f32 %v255, %v259
      %v265 = vmul.f32 %v252, %v263
      %266 = vrot.lane.b32.xlu0 %v205, 1
      %v267 = vpop.permute.xlu0 %266
      %269 = vrot.lane.b32.xlu0 %v199, 1
      %v270 = vpop.permute.xlu0 %269
      %vm271 = vcmask 7168
      %v272 = vsel %vm271, %v270, %v267
      %v275 = vsel %vm271, %v267, %v270
      %v276 = vlaneseq
      %v277 = vshrl.u32 %v276, 7
      %v278 = vsub.s32 3, %v277
      %v279 = vrot.slane %v200, %v278
      %v280 = vlaneseq
      %v281 = vshrl.u32 %v280, 7
      %v282 = vsub.s32 3, %v281
      %v283 = vrot.slane %v201, %v282
      %v284 = vmul.f32 %v275, %v279
      %v285 = vmul.f32 %v272, %v283
      %286 = vrot.lane.b32.xlu0 %v199, 127
      %v287 = vpop.permute.xlu0 %286
      %288 = vrot.lane.b32.xlu0 %v205, 127
      %v289 = vpop.permute.xlu0 %288
      %vm290 = vcmask 1039360
      %v291 = vsel %vm290, %v287, %v289
      %v295 = vsel %vm290, %v289, %v287
      %v296 = vlaneseq
      %v297 = vshrl.u32 %v296, 7
      %v298 = vsub.s32 5, %v297
      %v299 = vrot.slane %v200, %v298
      %v300 = vlaneseq
      %v301 = vshrl.u32 %v300, 7
      %v302 = vsub.s32 5, %v301
      %v303 = vrot.slane %v201, %v302
      %v304 = vmul.f32 %v291, %v299
      %v305 = vmul.f32 %v295, %v303
      %306 = vrot.lane.b32.xlu0 %v199, 113
      %v307 = vpop.permute.xlu0 %306
      %308 = vrot.lane.b32.xlu0 %v205, 113
      %v309 = vpop.permute.xlu0 %308
      %vm310 = vcmask 924672
      %v311 = vsel %vm310, %v307, %v309
      %v315 = vsel %vm310, %v309, %v307
      %v316 = vlaneseq
      %v317 = vshrl.u32 %v316, 7
      %v318 = vsub.s32 6, %v317
      %v319 = vrot.slane %v200, %v318
      %v320 = vlaneseq
      %v321 = vshrl.u32 %v320, 7
      %v322 = vsub.s32 6, %v321
      %v323 = vrot.slane %v201, %v322
      %v324 = vmul.f32 %v311, %v319
      %v325 = vmul.f32 %v315, %v323
      %326 = vrot.lane.b32.xlu0 %v199, 112
      %v327 = vpop.permute.xlu0 %326
      %328 = vrot.lane.b32.xlu0 %v205, 112
      %v329 = vpop.permute.xlu0 %328
      %vm330 = vcmask 916480
      %v331 = vsel %vm330, %v327, %v329
      %v335 = vsel %vm330, %v329, %v327
      %v336 = vlaneseq
      %v337 = vshrl.u32 %v336, 7
      %v338 = vsub.s32 7, %v337
      %v339 = vrot.slane %v200, %v338
      %v340 = vlaneseq
      %v341 = vshrl.u32 %v340, 7
      %v342 = vsub.s32 7, %v341
      %v343 = vrot.slane %v201, %v342
      %v344 = vmul.f32 %v331, %v339
      %v345 = vmul.f32 %v335, %v343
      %346 = vrot.lane.b32.xlu0 %v199, 111
      %v347 = vpop.permute.xlu0 %346
      %348 = vrot.lane.b32.xlu0 %v205, 111
      %v349 = vpop.permute.xlu0 %348
      %vm350 = vcmask 908288
      %v351 = vsel %vm350, %v347, %v349
      %v355 = vsel %vm350, %v349, %v347
      %v356 = vlaneseq
      %v357 = vshrl.u32 %v356, 7
      %v358 = vsub.s32 0, %v357
      %v359 = vrot.slane %v202, %v358
      %v360 = vlaneseq
      %v361 = vshrl.u32 %v360, 7
      %v362 = vsub.s32 0, %v361
      %v363 = vrot.slane %v203, %v362
      %v364 = vmul.f32 %v351, %v359
      %v365 = vmul.f32 %v355, %v363
      %v368 = vrot.slane %v244, 4
      %v369 = vrot.slane %v245, 4
      %v374 = vrot.slane %v284, 4
      %v375 = vrot.slane %v285, 4
      %v381 = vrot.slane %v304, 4
      %v382 = vrot.slane %v305, 4
      %v387 = vrot.slane %v344, 4
      %v388 = vrot.slane %v345, 4
      %vm391 = vcmask 1043456
      %v392 = vsel %vm391, %v224, %v368
      %v393 = vsel %vm391, %v225, %v369
      %v394 = vsel %vm391, %v264, %v374
      %v395 = vsel %vm391, %v265, %v375
      %v396 = vsel %vm391, %v199, %v381
      %v397 = vsel %vm391, %v205, %v382
      %v398 = vsel %vm391, %v324, %v387
      %v399 = vsel %vm391, %v325, %v388
      %v400 = vpack.c.bf16 %v394, %v392
      %v401 = vpack.c.bf16 %v395, %v393
      %v402 = vpack.c.bf16 %v398, %v396
      %v403 = vpack.c.bf16 %v399, %v397
      %v404 = vpack.c.bf16 %v364, %v364
      %v405 = vpack.c.bf16 %v365, %v365
      %v406 = vld [vmem:[%s1] sm:$0xf]
      %v407 = vld [vmem:[%s3] sm:$0xff]
      %409 = vset.pattern.permute.xlu0 0
      %410 = vperm.xlu0 %409, %v407
      %v411 = vpop.permute.xlu0 %410
      %vm413 = vcmask 293888
      %v415 = vsel %vm413, %v406, 0
      %vm417 = vcmask 1041408
      %v419 = vsel %vm417, %v404, 0
      %v422 = vsel %vm417, %v405, 0
      %424 = vmatprep.subr.bf16.mxu0 0
      %425 = vmatpush1.bf16.msra.mxu0 0
      %426 = vmatprep.subr.bf16.mxu0 0
      %427 = vmatpush1.bf16.msra.mxu0 0
      %428 = vmatprep.subr.bf16.mxu0 0
      %429 = vmatpush1.bf16.msra.mxu0 0
      %430 = vmatprep.subr.bf16.mxu0 0
      %431 = vmatpush1.bf16.msra.mxu0 0
      %432 = vmatprep.subr.bf16.mxu0 0
      %433 = vmatpush1.bf16.msra.mxu0 0
      %434 = vmatprep.subr.bf16.mxu0 %v422
      %435 = vmatpush1.bf16.msra.mxu0 %v419
      %436 = vmatprep.subr.bf16.mxu0 %v403
      %437 = vmatpush1.bf16.msra.mxu0 %v402
      %438 = vmatprep.subr.bf16.mxu0 %v401
      %439 = vmatpush1.bf16.msra.mxu0 %v400
      %440 = vmatprep.subr.bf16.mxu0 0
      %441 = vmatpush2.bf16.msra.mxu0 0
      %442 = vmatprep.subr.bf16.mxu0 0
      %443 = vmatpush2.bf16.msra.mxu0 0
      %444 = vmatprep.subr.bf16.mxu0 0
      %445 = vmatpush2.bf16.msra.mxu0 0
      %446 = vmatprep.subr.bf16.mxu0 0
      %447 = vmatpush2.bf16.msra.mxu0 0
      %448 = vmatprep.subr.bf16.mxu0 0
      %449 = vmatpush2.bf16.msra.mxu0 0
      %450 = vmatprep.subr.bf16.mxu0 0
      %451 = vmatpush2.bf16.msra.mxu0 0
      %452 = vmatprep.subr.bf16.mxu0 0
      %453 = vmatpush2.bf16.msra.mxu0 0
      %454 = vmatprep.subr.bf16.mxu0 0
      %455 = vmatpush2.bf16.msra.mxu0 0
      %456 = vmatprep.mubr.bf16.mxu0 0
      %457 = vmatmul.mubr.bf16.gmra.mxu0 %v415
      %v458 = vpop.f32.mrf.mxu0
      %v459 = vadd.f32 %v411, %v458
      %v460 = vpop.f32.mrf.mxu0
      %v461 = vadd.f32 %v411, %v460
      %v462 = vpop.f32.mrf.mxu0
      %v463 = vpop.f32.mrf.mxu0
      %464 = vdwg.mxu0
      %vm465 = vcmp.gt.f32.partialorder %v459, 0.0
      %vm466 = vcmp.gt.f32.partialorder %v461, 0.0
      %v467 = vmul.f32 %v459, 0.1
      %v468 = vmul.f32 %v461, 0.1
      %v469 = vsel %vm465, %v459, %v467
      %v470 = vsel %vm466, %v461, %v468
      %471 = vst [vmem:[%s197] sm:$0xff] %v469
      %472 = vst [vmem:[%s197 + $0x8] sm:$0xff] %v470
      %p473 = scmp.lt.s32.totalorder %s15, 1
      %s474 = scalar_select %p473, %s15, 1
      %s475 = smul.addr %s474, 2
      %s476 = smul.addr %s475, 8
      %s477 = scalar_lea.vmem %s4, %s476
      // Predicated region
      $region37: #{basic_conv.1} parent=35 // pred_check
        %p478 = pneg %p122
      $region38: #{basic_conv.1} parent=35 // pred_check_branch
        %480 = sbr.rel (%p478) target = $region40
      $region39: #{basic_conv.1} parent=35 // pred_region
        _
      $region40: #{basic_conv.1} parent=35 // pred_fallthru
        _
    $region36: #{basic_conv.1} parent=5 // pred_fallthru
      _
    %p481 = scmp.le.s32.totalorder 2, %s10
    // Predicated region
    $region41: #{basic_conv.1} parent=5 // pred_check
      %p482 = pneg %p481
    $region42: #{basic_conv.1} parent=5 // pred_check_branch
      %484 = sbr.rel (%p482) target = $region44
    $region43: #{basic_conv.1} parent=5 // pred_region
      %s485 = ssub.s32 %s10, 2
      // Predicated region
      $region45: #{basic_conv.1} parent=43 // pred_check
        %p486 = pneg %p128
      $region46: #{basic_conv.1} parent=43 // pred_check_branch
        %488 = sbr.rel (%p486) target = $region48
      $region47: #{basic_conv.1} parent=43 // pred_region
        %p489 = scmp.lt.s32.totalorder %s16, 1
        %s490 = scalar_select %p489, %s16, 1
        %s491 = smul.addr %s490, 2
        %s492 = smul.addr %s491, 8
        %s493 = scalar_lea.vmem %s4, %s492
      $region48: #{basic_conv.1} parent=43 // pred_fallthru
        _
    $region44: #{basic_conv.1} parent=5 // pred_fallthru
      _
  $region6: #{basic_conv.1} parent=0 // loop_footer
    %s14 = sadd.s32 1, %s10
  $region7: #{basic_conv.1} parent=0 // loop_footer_branch
    %9 = sbr.rel target = $region3
  $region8: #{basic_conv.1} parent=0 // loop_exit
    _

</llo_original>
